<compile_context>
chip_gen: v7x
topology: tpu7x:2x2x1
jax: 0.10.0
libtpu: 0.0.40
codegen_flags: <defaults>
</compile_context>

<pallas_src>
import functools

import jax
import jax.numpy as jnp
from jax.experimental import pallas as pl
from jax.experimental.pallas import tpu as pltpu


def _round_up(a: int, m: int) -> int:
    return ((a + m - 1) // m) * m


def _td_linear_kernel(x_ref, w_ref, b_ref, o_ref, acc_ref):
    # x_ref: (tm, tk), w_ref: (tk, tn), b_ref: (1, tn), o_ref: (tm, tn)
    k = pl.program_id(2)

    @pl.when(k == 0)
    def _():
        acc_ref[...] = jnp.zeros_like(acc_ref)

    acc_ref[...] += jnp.dot(
        x_ref[...], w_ref[...], preferred_element_type=jnp.float32
    )

    @pl.when(k == pl.num_programs(2) - 1)
    def _():
        # Bias + ReLU epilogue in f32 on the VPU (safe on v5e: no bf16 VALU).
        y = acc_ref[...] + b_ref[...]
        o_ref[...] = jnp.maximum(y, 0.0).astype(o_ref.dtype)


@functools.partial(jax.jit, static_argnames=("tm", "tn", "tk"))
def _td_linear_call(x_flat, w, b, *, tm, tn, tk):
    n_rows, f_in = x_flat.shape
    f_out = w.shape[1]

    # --- pick tiles & padded dims (lane-dense, MXU-aligned) ----------------
    f_in_p = _round_up(f_in, 128)
    tk = min(tk, f_in_p)
    f_in_p = _round_up(f_in_p, tk)

    f_out_p = _round_up(f_out, 128)
    tn = min(tn, f_out_p)
    f_out_p = _round_up(f_out_p, tn)

    tm = min(tm, _round_up(n_rows, 8))          # tm stays a multiple of 8
    n_rows_p = _round_up(n_rows, tm)

    # --- zero-pad (padding contributes nothing to the dot; extra output
    #     rows/cols are sliced away below) ---------------------------------
    x_p = jnp.pad(x_flat, ((0, n_rows_p - n_rows), (0, f_in_p - f_in)))
    w_p = jnp.pad(w, ((0, f_in_p - f_in), (0, f_out_p - f_out)))
    b_p = jnp.pad(b, ((0, f_out_p - f_out),)).reshape(1, f_out_p)

    grid = (n_rows_p // tm, f_out_p // tn, f_in_p // tk)

    out_p = pl.pallas_call(
        _td_linear_kernel,
        out_shape=jax.ShapeDtypeStruct((n_rows_p, f_out_p), x_flat.dtype),
        grid_spec=pltpu.PrefetchScalarGridSpec(
            num_scalar_prefetch=0,
            grid=grid,
            in_specs=[
                pl.BlockSpec((tm, tk), lambda i, j, k: (i, k)),
                pl.BlockSpec((tk, tn), lambda i, j, k: (k, j)),
                pl.BlockSpec((1, tn), lambda i, j, k: (0, j)),
            ],
            out_specs=pl.BlockSpec((tm, tn), lambda i, j, k: (i, j)),
            scratch_shapes=[pltpu.VMEM((tm, tn), jnp.float32)],
        ),
        compiler_params=pltpu.CompilerParams(
            # rows / n-tiles are embarrassingly parallel (megacore on v7x),
            # k is the reduction axis (accumulator resident across it).
            dimension_semantics=("parallel", "parallel", "arbitrary"),
            vmem_limit_bytes=48 * 1024 * 1024,   # headroom under v7x's 64 MiB
        ),
    )(x_p, w_p, b_p)

    return out_p[:n_rows, :f_out]


def time_distributed_linear(x, w, b, *, tm=512, tn=512, tk=512):
    """Pallas TimeDistributed(nn.Linear(F_in, F_out), relu).

    x: (T, B, F_in) or (N, F_in)   (<=2-D bypasses the reshape, as in torch)
    w: (F_in, F_out)               (transposed vs. torch's (out, in) layout)
    b: (F_out,)
    """
    # TODO(synk): optionally cast x/w to bfloat16 before the dot on v6e/v7x
    # for ~4.6x MXU throughput when the model tolerates it (kept f32 here to
    # match the reference numerics exactly).
    if x.ndim <= 2:
        x_flat = x if x.ndim == 2 else x.reshape(1, -1)
        return _td_linear_call(x_flat, w, b, tm=tm, tn=tn, tk=tk)

    t, bs = x.shape[0], x.shape[1]
    x_flat = x.reshape(t * bs, x.shape[2])
    out_flat = _td_linear_call(x_flat, w, b, tm=tm, tn=tn, tk=tk)
    return out_flat.reshape(t, bs, out_flat.shape[1])


if __name__ == "__main__":
    T, B, F_IN, F_OUT = 8, 4, 32, 32

    key = jax.random.PRNGKey(0)
    kx, kw, kb = jax.random.split(key, 3)

    x = jax.random.normal(kx, (T, B, F_IN), dtype=jnp.float32)
    # Deterministic synthetic parameters for the wrapped nn.Linear(F_IN, F_OUT)
    w = jax.random.normal(kw, (F_IN, F_OUT), dtype=jnp.float32) * 0.1
    b = jax.random.normal(kb, (F_OUT,), dtype=jnp.float32) * 0.1

    y = jax.block_until_ready(time_distributed_linear(x, w, b))

    # Pure-JAX reference of the TimeDistributed forward semantics
    ref = jnp.maximum(x.reshape(T * B, F_IN) @ w + b, 0.0).reshape(T, B, F_OUT)

    assert y.shape == (T, B, F_OUT)
    assert jnp.allclose(y, ref, atol=1e-5, rtol=1e-5)

    # <=2-D path (module applied directly, no reshape), with a ragged row
    # count to exercise the pad/slice tail handling.
    x2d = jax.random.normal(kx, (13, F_IN), dtype=jnp.float32)
    y2d = jax.block_until_ready(time_distributed_linear(x2d, w, b))
    ref2d = jnp.maximum(x2d @ w + b, 0.0)
    assert y2d.shape == ref2d.shape
    assert jnp.allclose(y2d, ref2d, atol=1e-5, rtol=1e-5)

    print("KERNEL_OK")
</pallas_src>

<mosaic_0001>
module attributes {stable_mosaic.version = 11 : i64} {
  func.func @_td_linear_kernel(%arg0: i32, %arg1: i32, %arg2: i32, %arg3: memref<32x128xf32, #tpu.memory_space<vmem>>, %arg4: memref<128x128xf32, #tpu.memory_space<vmem>>, %arg5: memref<1x128xf32, #tpu.memory_space<vmem>>, %arg6: memref<32x128xf32, #tpu.memory_space<vmem>>, %arg7: memref<32x128xf32, #tpu.memory_space<vmem>>) attributes {dimension_semantics = [#tpu.dimension_semantics<parallel>, #tpu.dimension_semantics<parallel>, #tpu.dimension_semantics<arbitrary>], iteration_bounds = array<i64: 1, 1, 1>, scalar_prefetch = 0 : i64, scratch_operands = 1 : i64, tpu.core_type = #tpu.core_type<tc>, window_params = [{transform_indices = @transform_0, window_bounds = array<i64: 32, 128>}, {transform_indices = @transform_1, window_bounds = array<i64: 128, 128>}, {transform_indices = @transform_2, window_bounds = array<i64: 1, 128>}, {transform_indices = @transform_3, window_bounds = array<i64: 32, 128>}]} {
    %c0_i32 = arith.constant 0 : i32
    %0 = arith.cmpi eq, %arg2, %c0_i32 : i32
    %1 = arith.extui %0 : i1 to i32
    %c0_i32_0 = arith.constant 0 : i32
    %2 = arith.cmpi ne, %1, %c0_i32_0 : i32
    scf.if %2 {
      %cst_10 = arith.constant 0.000000e+00 : f32
      %12 = vector.broadcast %cst_10 : f32 to vector<32x128xf32>
      %c0_11 = arith.constant 0 : index
      %c0_12 = arith.constant 0 : index
      %13 = vector.load %arg7[%c0_11, %c0_12] : memref<32x128xf32, #tpu.memory_space<vmem>>, vector<32x128xf32>
      tpu.vector_store %arg7[%c0_11, %c0_12], %12 {strides = array<i32>} : memref<32x128xf32, #tpu.memory_space<vmem>>, vector<32x128xf32>,
    } else {
    }
    %c0 = arith.constant 0 : index
    %c0_1 = arith.constant 0 : index
    %3 = vector.load %arg7[%c0, %c0_1] : memref<32x128xf32, #tpu.memory_space<vmem>>, vector<32x128xf32>
    %c0_2 = arith.constant 0 : index
    %c0_3 = arith.constant 0 : index
    %4 = vector.load %arg3[%c0_2, %c0_3] : memref<32x128xf32, #tpu.memory_space<vmem>>, vector<32x128xf32>
    %c0_4 = arith.constant 0 : index
    %c0_5 = arith.constant 0 : index
    %5 = vector.load %arg4[%c0_4, %c0_5] : memref<128x128xf32, #tpu.memory_space<vmem>>, vector<128x128xf32>
    %cst = arith.constant dense<0.000000e+00> : vector<32x128xf32>
    %6 = tpu.matmul %4, %5, %cst {dimension_numbers = #tpu.dot_dimension_numbers<[1], [0], [0], [1], [0, 0, 1, 1], [], []>} : vector<32x128xf32>, vector<128x128xf32>, vector<32x128xf32> -> vector<32x128xf32>
    %7 = arith.addf %3, %6 : vector<32x128xf32>
    %c0_6 = arith.constant 0 : index
    %c0_7 = arith.constant 0 : index
    %8 = vector.load %arg7[%c0_6, %c0_7] : memref<32x128xf32, #tpu.memory_space<vmem>>, vector<32x128xf32>
    tpu.vector_store %arg7[%c0_6, %c0_7], %7 {strides = array<i32>} : memref<32x128xf32, #tpu.memory_space<vmem>>, vector<32x128xf32>,
    %c0_i32_8 = arith.constant 0 : i32
    %9 = arith.cmpi eq, %arg2, %c0_i32_8 : i32
    %10 = arith.extui %9 : i1 to i32
    %c0_i32_9 = arith.constant 0 : i32
    %11 = arith.cmpi ne, %10, %c0_i32_9 : i32
    scf.if %11 {
      %c0_10 = arith.constant 0 : index
      %c0_11 = arith.constant 0 : index
      %12 = vector.load %arg7[%c0_10, %c0_11] : memref<32x128xf32, #tpu.memory_space<vmem>>, vector<32x128xf32>
      %c0_12 = arith.constant 0 : index
      %c0_13 = arith.constant 0 : index
      %13 = vector.load %arg5[%c0_12, %c0_13] : memref<1x128xf32, #tpu.memory_space<vmem>>, vector<1x128xf32>
      %14 = vector.broadcast %13 : vector<1x128xf32> to vector<32x128xf32>
      %15 = arith.addf %12, %14 : vector<32x128xf32>
      %cst_14 = arith.constant 0.000000e+00 : f32
      %16 = vector.broadcast %cst_14 : f32 to vector<32x128xf32>
      %17 = arith.maximumf %15, %16 : vector<32x128xf32>
      %c0_15 = arith.constant 0 : index
      %c0_16 = arith.constant 0 : index
      %18 = vector.load %arg6[%c0_15, %c0_16] : memref<32x128xf32, #tpu.memory_space<vmem>>, vector<32x128xf32>
      tpu.vector_store %arg6[%c0_15, %c0_16], %17 {strides = array<i32>} : memref<32x128xf32, #tpu.memory_space<vmem>>, vector<32x128xf32>,
    } else {
    }
    return
  }
  func.func @transform_0(%arg0: i32, %arg1: i32, %arg2: i32) -> (i32, i32) {
    %c0_i32 = arith.constant 0 : i32
    return %arg0, %arg2 : i32, i32
  }
  func.func @transform_1(%arg0: i32, %arg1: i32, %arg2: i32) -> (i32, i32) {
    %c0_i32 = arith.constant 0 : i32
    return %arg2, %arg1 : i32, i32
  }
  func.func @transform_2(%arg0: i32, %arg1: i32, %arg2: i32) -> (i32, i32) {
    %c0_i32 = arith.constant 0 : i32
    %c0_i32_0 = arith.constant 0 : i32
    return %c0_i32, %arg1 : i32, i32
  }
  func.func @transform_3(%arg0: i32, %arg1: i32, %arg2: i32) -> (i32, i32) {
    %c0_i32 = arith.constant 0 : i32
    return %arg0, %arg1 : i32, i32
  }
}

</mosaic_0001>

<llo_original>
// kernel: _td_linear_call.1
$region0: #{_td_linear_call.1}
  #allocation0 [shape = 'u32[]', space=smem, size = 0x4, offset = 0x4, fixed_abs, tag = 'smem constant byte address 0x4 - core index']
  #allocation1 [shape = 'u32[144,128]{1,0:T(1,128)}', space=vmem, size = 0x12000, scoped, tag = 'internal scratch']
  #allocation2 [shape = 'f32[32,128]{1,0:T(8,128)}', space=vmem, size = 0x4000, scoped, tag = 'scratch operand']
  %s0 = inlined_call_operand.vmem [shape: f32[32,128], index: 0, kind: input, shape index: {}]
  %s1 = inlined_call_operand.vmem [shape: f32[128,128], index: 1, kind: input, shape index: {}]
  %s2 = inlined_call_operand.vmem [shape: f32[1,128], index: 2, kind: input, shape index: {}]
  %s3 = inlined_call_operand.hbm [shape: f32[32,128], index: 3, kind: output, shape index: {}]
  %s4 = sld [smem:[#allocation0]]
  $region30: #{_td_linear_call.1} parent=0
    _
  %s6 = ssub.s32 1, %s4
  %s7 = scalar_select 0, %s6, %s4
  $region1: #{_td_linear_call.1} parent=0
    #allocation3 [shape = 'u8[16384]{0}', space=vmem, size = 0x4000, scoped, tag = 'output window, operand 0, single buffered']
    #allocation4 [shape = 's32[1]{0}', space=sflag, size = 0x4, scoped, tag = 'scoped memory for _td_linear_call.1']
    %8 = vsyncpa [#allocation4], 0
    // Predicated region
    $region2: #{_td_linear_call.1} parent=1 // pred_check
      _
    $region3: #{_td_linear_call.1} parent=1 // pred_check_branch
      %10 = sbr.rel (0) target = $region5
    $region4: #{_td_linear_call.1} parent=1 // pred_region
      _
    $region5: #{_td_linear_call.1} parent=1 // pred_fallthru
      _
    // Predicated region
    $region6: #{_td_linear_call.1} parent=1 // pred_check
      _
    $region7: #{_td_linear_call.1} parent=1 // pred_check_branch
      %12 = sbr.rel (0) target = $region9
    $region8: #{_td_linear_call.1} parent=1 // pred_region
      _
    $region9: #{_td_linear_call.1} parent=1 // pred_fallthru
      _
    // Predicated region
    $region10: #{_td_linear_call.1} parent=1 // pred_check
      _
    $region11: #{_td_linear_call.1} parent=1 // pred_check_branch
      %14 = sbr.rel (0) target = $region13
    $region12: #{_td_linear_call.1} parent=1 // pred_region
      _
    $region13: #{_td_linear_call.1} parent=1 // pred_fallthru
      _
    %p15 = scmp.eq.s32.totalorder 0, 0
    // Predicated region
    $region14: #{_td_linear_call.1} parent=1 // pred_check
      %p16 = pneg %p15
    $region15: #{_td_linear_call.1} parent=1 // pred_check_branch
      %18 = sbr.rel (%p16) target = $region17
    $region16: #{_td_linear_call.1} parent=1 // pred_region
      %19 = vst [vmem:[#allocation2] sm:$0xff] 0.0
      %20 = vst [vmem:[#allocation2 + $0x8] sm:$0xff] 0.0
      %21 = vst [vmem:[#allocation2 + $0x10] sm:$0xff] 0.0
      %22 = vst [vmem:[#allocation2 + $0x18] sm:$0xff] 0.0
    $region17: #{_td_linear_call.1} parent=1 // pred_fallthru
      _
    %v23 = vld [vmem:[#allocation2] sm:$0xff]
    %v24 = vld [vmem:[#allocation2 + $0x8] sm:$0xff]
    %v25 = vld [vmem:[#allocation2 + $0x10] sm:$0xff]
    %v26 = vld [vmem:[#allocation2 + $0x18] sm:$0xff]
    %v27 = vld [vmem:[%s0] sm:$0xff]
    %v28 = vld [vmem:[%s0 + $0x8] sm:$0xff]
    %v29 = vld [vmem:[%s0 + $0x10] sm:$0xff]
    %v30 = vld [vmem:[%s0 + $0x18] sm:$0xff]
    %v31 = vld [vmem:[%s1] sm:$0xff]
    %v32 = vld [vmem:[%s1 + $0x8] sm:$0xff]
    %v33 = vld [vmem:[%s1 + $0x10] sm:$0xff]
    %v34 = vld [vmem:[%s1 + $0x18] sm:$0xff]
    %v35 = vld [vmem:[%s1 + $0x20] sm:$0xff]
    %v36 = vld [vmem:[%s1 + $0x28] sm:$0xff]
    %v37 = vld [vmem:[%s1 + $0x30] sm:$0xff]
    %v38 = vld [vmem:[%s1 + $0x38] sm:$0xff]
    %v39 = vld [vmem:[%s1 + $0x40] sm:$0xff]
    %v40 = vld [vmem:[%s1 + $0x48] sm:$0xff]
    %v41 = vld [vmem:[%s1 + $0x50] sm:$0xff]
    %v42 = vld [vmem:[%s1 + $0x58] sm:$0xff]
    %v43 = vld [vmem:[%s1 + $0x60] sm:$0xff]
    %v44 = vld [vmem:[%s1 + $0x68] sm:$0xff]
    %v45 = vld [vmem:[%s1 + $0x70] sm:$0xff]
    %v46 = vld [vmem:[%s1 + $0x78] sm:$0xff]
    %47 = vmatprep.subr.mxu0 0.0
    %48 = vmatpush1.msra.mxu0 %v31
    %49 = vmatprep.subr.mxu0 0.0
    %50 = vmatpush1.msra.mxu0 %v32
    %51 = vmatprep.subr.mxu0 0.0
    %52 = vmatpush1.msra.mxu0 %v33
    %53 = vmatprep.subr.mxu0 0.0
    %54 = vmatpush1.msra.mxu0 %v34
    %55 = vmatprep.subr.mxu0 0.0
    %56 = vmatpush1.msra.mxu0 %v35
    %57 = vmatprep.subr.mxu0 0.0
    %58 = vmatpush1.msra.mxu0 %v36
    %59 = vmatprep.subr.mxu0 0.0
    %60 = vmatpush1.msra.mxu0 %v37
    %61 = vmatprep.subr.mxu0 0.0
    %62 = vmatpush1.msra.mxu0 %v38
    %63 = vmatprep.subr.mxu0 0.0
    %64 = vmatpush1.msra.mxu0 %v39
    %65 = vmatprep.subr.mxu0 0.0
    %66 = vmatpush1.msra.mxu0 %v40
    %67 = vmatprep.subr.mxu0 0.0
    %68 = vmatpush1.msra.mxu0 %v41
    %69 = vmatprep.subr.mxu0 0.0
    %70 = vmatpush1.msra.mxu0 %v42
    %71 = vmatprep.subr.mxu0 0.0
    %72 = vmatpush1.msra.mxu0 %v43
    %73 = vmatprep.subr.mxu0 0.0
    %74 = vmatpush1.msra.mxu0 %v44
    %75 = vmatprep.subr.mxu0 0.0
    %76 = vmatpush1.msra.mxu0 %v45
    %77 = vmatprep.subr.mxu0 0.0
    %78 = vmatpush1.msra.mxu0 %v46
    %79 = vmatprep.subr.mxu0 0.0
    %80 = vmatpush1.msra.mxu0 0.0
    %81 = vmatprep.subr.mxu0 0.0
    %82 = vmatpush1.msra.mxu0 0.0
    %83 = vmatprep.subr.mxu0 0.0
    %84 = vmatpush1.msra.mxu0 0.0
    %85 = vmatprep.subr.mxu0 0.0
    %86 = vmatpush1.msra.mxu0 0.0
    %87 = vmatprep.subr.mxu0 0.0
    %88 = vmatpush1.msra.mxu0 0.0
    %89 = vmatprep.subr.mxu0 0.0
    %90 = vmatpush1.msra.mxu0 0.0
    %91 = vmatprep.subr.mxu0 0.0
    %92 = vmatpush1.msra.mxu0 0.0
    %93 = vmatprep.subr.mxu0 0.0
    %94 = vmatpush1.msra.mxu0 0.0
    %95 = vmatprep.subr.mxu0 0.0
    %96 = vmatpush1.msra.mxu0 0.0
    %97 = vmatprep.subr.mxu0 0.0
    %98 = vmatpush1.msra.mxu0 0.0
    %99 = vmatprep.subr.mxu0 0.0
    %100 = vmatpush1.msra.mxu0 0.0
    %101 = vmatprep.subr.mxu0 0.0
    %102 = vmatpush1.msra.mxu0 0.0
    %103 = vmatprep.subr.mxu0 0.0
    %104 = vmatpush1.msra.mxu0 0.0
    %105 = vmatprep.subr.mxu0 0.0
    %106 = vmatpush1.msra.mxu0 0.0
    %107 = vmatprep.subr.mxu0 0.0
    %108 = vmatpush1.msra.mxu0 0.0
    %109 = vmatprep.subr.mxu0 0.0
    %110 = vmatpush1.msra.mxu0 0.0
    %111 = vmatprep.mubr.f32.mxu0 0.0
    %112 = vmatmul.mubr.f32.gmra.mrb[0].mxu0 %v27
    %v113 = vpop.f32.mrb[0].mxu0
    %v114 = vadd.f32 0.0, %v113
    %v115 = vpop.f32.mrb[0].mxu0
    %116 = vmatprep.mubr.f32.mxu0 0.0
    %117 = vmatmul.mubr.f32.gmra.mrb[0].mxu0 %v28
    %v118 = vpop.f32.mrb[0].mxu0
    %v119 = vadd.f32 0.0, %v118
    %v120 = vpop.f32.mrb[0].mxu0
    %121 = vmatprep.mubr.f32.mxu0 0.0
    %122 = vmatmul.mubr.f32.gmra.mrb[0].mxu0 %v29
    %v123 = vpop.f32.mrb[0].mxu0
    %v124 = vadd.f32 0.0, %v123
    %v125 = vpop.f32.mrb[0].mxu0
    %126 = vmatprep.mubr.f32.mxu0 0.0
    %127 = vmatmul.mubr.f32.gmra.mrb[0].mxu0 %v30
    %v128 = vpop.f32.mrb[0].mxu0
    %v129 = vadd.f32 0.0, %v128
    %v130 = vpop.f32.mrb[0].mxu0
    %131 = vdwg.mxu0
    %v132 = vadd.f32 %v23, %v114
    %v133 = vadd.f32 %v24, %v119
    %v134 = vadd.f32 %v25, %v124
    %v135 = vadd.f32 %v26, %v129
    %136 = vst [vmem:[#allocation2] sm:$0xff] %v132
    %137 = vst [vmem:[#allocation2 + $0x8] sm:$0xff] %v133
    %138 = vst [vmem:[#allocation2 + $0x10] sm:$0xff] %v134
    %139 = vst [vmem:[#allocation2 + $0x18] sm:$0xff] %v135
    // Predicated region
    $region18: #{_td_linear_call.1} parent=1 // pred_check
      %p140 = pneg %p15
    $region19: #{_td_linear_call.1} parent=1 // pred_check_branch
      %142 = sbr.rel (%p140) target = $region21
    $region20: #{_td_linear_call.1} parent=1 // pred_region
      %v143 = vld [vmem:[#allocation2] sm:$0xff]
      %v144 = vld [vmem:[#allocation2 + $0x8] sm:$0xff]
      %v145 = vld [vmem:[#allocation2 + $0x10] sm:$0xff]
      %v146 = vld [vmem:[#allocation2 + $0x18] sm:$0xff]
      %v147 = vld [vmem:[%s2] sm:$0x1]
      %v149 = vlaneseq
      %v150 = vshrl.u32 %v149, 7
      %v151 = vsub.s32 0, %v150
      %v152 = vrot.slane %v147, %v151
      %v154 = vadd.f32 %v143, %v152
      %v155 = vadd.f32 %v144, %v152
      %v156 = vadd.f32 %v145, %v152
      %v157 = vadd.f32 %v146, %v152
      %v158 = vmax.f32 %v154, 0.0
      %v159 = vmax.f32 %v155, 0.0
      %v160 = vmax.f32 %v156, 0.0
      %v161 = vmax.f32 %v157, 0.0
      %162 = vst [vmem:[#allocation3] sm:$0xff] %v158
      %163 = vst [vmem:[#allocation3 + $0x8] sm:$0xff] %v159
      %164 = vst [vmem:[#allocation3 + $0x10] sm:$0xff] %v160
      %165 = vst [vmem:[#allocation3 + $0x18] sm:$0xff] %v161
    $region21: #{_td_linear_call.1} parent=1 // pred_fallthru
      _
    // Predicated region
    $region22: #{_td_linear_call.1} parent=1 // pred_check
      _
    $region23: #{_td_linear_call.1} parent=1 // pred_check_branch
      %167 = sbr.rel (0) target = $region25
    $region24: #{_td_linear_call.1} parent=1 // pred_region
      %s169 = ssub.s32 512, 512
      %170 = vsyncadd [#allocation4], %s169
      %s171 = sshll.u32 [#allocation3], 4
      %s172 = int_to_ptr.vmem [resolvable:$true] %s171
      %177 = dma.vmem_to_hbm [thread:$0]  %s172, 512, %s3, [#allocation4], 128, 128, 8
    $region25: #{_td_linear_call.1} parent=1 // pred_fallthru
      _
    // Predicated region
    $region26: #{_td_linear_call.1} parent=1 // pred_check
      _
    $region27: #{_td_linear_call.1} parent=1 // pred_check_branch
      %179 = sbr.rel (0) target = $region29
    $region28: #{_td_linear_call.1} parent=1 // pred_region
      %180 = dma.done [#allocation4], 512
    $region29: #{_td_linear_call.1} parent=1 // pred_fallthru
      _
    %181 = vsyncpa [#allocation4], 1

</llo_original>
